<compile_context>
chip_gen: v7x
topology: tpu7x:2x2x1
jax: 0.10.0
libtpu: 0.0.40
codegen_flags: <defaults>
</compile_context>

<pallas_src>
import functools
import math

import jax
import jax.numpy as jnp
from jax.experimental import pallas as pl
from jax.experimental.pallas import tpu as pltpu

LANE = 128
SUBLANE_BF16 = 16   # bf16 packs 16 sublanes per vreg
ACT_PAD = 8         # mu output lanes padded to a multiple of 8 (block dim == full dim)


def _round_up(x, m):
    return (x + m - 1) // m * m


def actor_kernel(x_ref, w1_ref, b1_ref, w2_ref, b2_ref, w3_ref, b3_ref, o_ref,
                 *, bf16_elem):
    """tanh( mu( relu( fc2( relu( fc1(x) ) ) ) ) ) for one batch tile."""
    x = x_ref[...]                                                       # (TB, d_in) bf16

    # fc1 + relu  (bf16 operands, f32 MXU accumulate)
    h1 = jnp.dot(x, w1_ref[...], preferred_element_type=jnp.float32)
    if bf16_elem:   # v6e/v7x: bf16 VALU -> halve elementwise vreg work
        h1 = jnp.maximum(h1.astype(jnp.bfloat16) + b1_ref[...].astype(jnp.bfloat16), 0.0)
    else:           # v5e: no bf16 VALU -> keep elementwise in f32
        h1 = jnp.maximum(h1 + b1_ref[...], 0.0).astype(jnp.bfloat16)

    # fc2 + relu
    h2 = jnp.dot(h1, w2_ref[...], preferred_element_type=jnp.float32)
    if bf16_elem:
        h2 = jnp.maximum(h2.astype(jnp.bfloat16) + b2_ref[...].astype(jnp.bfloat16), 0.0)
    else:
        h2 = jnp.maximum(h2 + b2_ref[...], 0.0).astype(jnp.bfloat16)

    # mu + tanh  (narrow 8-lane padded output, stored bf16)
    out = jnp.dot(h2, w3_ref[...], preferred_element_type=jnp.float32) + b3_ref[...]
    o_ref[...] = jnp.tanh(out).astype(o_ref.dtype)


@functools.partial(jax.jit, static_argnames=("n_actions", "block_b", "bf16_elem"))
def actor_forward(state, params, n_actions, block_b=2048, bf16_elem=True):
    """state: (B, D_in) float32; params: kernel-ready dict (see init_params).

    Weights are stored transposed vs. PyTorch, i.e. (in_features, out_features),
    so each layer is y = x @ W + b. w3/b3 arrive already lane-padded to ACT_PAD.
    """
    w1, b1 = params["w1"], params["b1"]
    w2, b2 = params["w2"], params["b2"]
    w3, b3 = params["w3"], params["b3"]
    B, d_in = state.shape
    f1 = w1.shape[1]
    f2 = w2.shape[1]
    a_pad = w3.shape[1]

    # Batch tile: multiple of 16 (bf16 sublane packing) for legality even with odd
    # user block_b, capped by the padded batch so tiny batches take one grid step.
    tb = min(block_b, _round_up(B, SUBLANE_BF16))
    tb = max(SUBLANE_BF16, _round_up(tb, SUBLANE_BF16))
    b_pad = _round_up(B, tb)

    x = state.astype(jnp.bfloat16)
    if b_pad != B:
        x = jnp.pad(x, ((0, b_pad - B), (0, 0)))

    const = lambda i: (0, 0)   # weights / biases: same block every step (VMEM-resident)
    kernel = functools.partial(actor_kernel, bf16_elem=bf16_elem)
    out = pl.pallas_call(
        kernel,
        out_shape=jax.ShapeDtypeStruct((b_pad, a_pad), jnp.bfloat16),
        grid=(b_pad // tb,),
        in_specs=[
            pl.BlockSpec((tb, d_in), lambda i: (i, 0)),   # state tile (pipelined)
            pl.BlockSpec((d_in, f1), const),              # w1
            pl.BlockSpec((1, f1), const),                 # b1 (f32)
            pl.BlockSpec((f1, f2), const),                # w2
            pl.BlockSpec((1, f2), const),                 # b2 (f32)
            pl.BlockSpec((f2, a_pad), const),             # w3 (8-lane padded)
            pl.BlockSpec((1, a_pad), const),              # b3 (8-lane padded, f32)
        ],
        out_specs=pl.BlockSpec((tb, a_pad), lambda i: (i, 0)),
        compiler_params=pltpu.CompilerParams(
            dimension_semantics=("parallel",),            # megacore sharding on v7x
            vmem_limit_bytes=32 * 1024 * 1024,            # headroom for 2048-row tiles on v5e
        ),
    )(x, w1, b1, w2, b2, w3, b3)
    return out[:B, :n_actions].astype(jnp.float32)


def init_params(key, input_dim, fc1_dims, fc2_dims, n_actions):
    """Deterministic init mimicking nn.Linear default: U(-1/sqrt(fan_in), 1/sqrt(fan_in)).

    Returns kernel-ready params: weights transposed to (in, out) and cast to bf16
    (MXU-native), biases kept f32; the mu layer is lane-padded to ACT_PAD once here
    (hoisted out of the per-call forward).
    """
    def linear(key, fan_in, fan_out):
        kw, kb = jax.random.split(key)
        bound = 1.0 / math.sqrt(fan_in)
        w = jax.random.uniform(kw, (fan_in, fan_out), jnp.float32, -bound, bound)
        b = jax.random.uniform(kb, (1, fan_out), jnp.float32, -bound, bound)
        return w, b

    k1, k2, k3 = jax.random.split(key, 3)
    w1, b1 = linear(k1, input_dim, fc1_dims)
    w2, b2 = linear(k2, fc1_dims, fc2_dims)
    w3, b3 = linear(k3, fc2_dims, n_actions)

    a_pad = _round_up(max(n_actions, 1), ACT_PAD)
    w3 = jnp.pad(w3, ((0, 0), (0, a_pad - n_actions)))
    b3 = jnp.pad(b3, ((0, 0), (0, a_pad - n_actions)))
    return {
        "w1": w1.astype(jnp.bfloat16), "b1": b1,
        "w2": w2.astype(jnp.bfloat16), "b2": b2,
        "w3": w3.astype(jnp.bfloat16), "b3": b3,
    }


def default_bf16_elementwise():
    """bf16 VALU exists on v6e/v7x; fall back to f32 elementwise on older chips."""
    kind = jax.devices()[0].device_kind.lower()
    return not any(g in kind for g in ("v2", "v3", "v4", "v5"))


def actor_forward_ref(state, params, n_actions, bf16_elem=True):
    """Pure-JAX reference mirroring the kernel's bf16-operand / f32-accumulate math."""
    x = state.astype(jnp.bfloat16)

    h1 = jnp.dot(x, params["w1"], preferred_element_type=jnp.float32)
    if bf16_elem:
        h1 = jnp.maximum(h1.astype(jnp.bfloat16) + params["b1"].astype(jnp.bfloat16), 0.0)
    else:
        h1 = jnp.maximum(h1 + params["b1"], 0.0).astype(jnp.bfloat16)

    h2 = jnp.dot(h1, params["w2"], preferred_element_type=jnp.float32)
    if bf16_elem:
        h2 = jnp.maximum(h2.astype(jnp.bfloat16) + params["b2"].astype(jnp.bfloat16), 0.0)
    else:
        h2 = jnp.maximum(h2 + params["b2"], 0.0).astype(jnp.bfloat16)

    out = jnp.dot(h2, params["w3"], preferred_element_type=jnp.float32) + params["b3"]
    out = jnp.tanh(out).astype(jnp.bfloat16).astype(jnp.float32)
    return out[:, :n_actions]


# TODO(synk): optimizer (Adam), checkpoint save/load, and device placement from the
# PyTorch module are training/persistence utilities with no forward-pass compute;
# only forward() is implemented as a kernel.

if __name__ == "__main__":
    # Shapes consistent with the module: input_dims=[8], fc1=fc2=256, n_actions=4
    input_dim = 8
    fc1_dims = 256
    fc2_dims = 256
    n_actions = 4

    key = jax.random.PRNGKey(0)
    kp, kx1, kx2, kx3 = jax.random.split(key, 4)
    params = init_params(kp, input_dim, fc1_dims, fc2_dims, n_actions)
    bf16_elem = default_bf16_elementwise()

    # Case 1: tiny batch (single grid step, batch padded to one 16-row bf16 tile).
    state = jax.random.normal(kx1, (2, input_dim), dtype=jnp.float32)
    out = jax.block_until_ready(actor_forward(state, params, n_actions, bf16_elem=bf16_elem))
    ref = actor_forward_ref(state, params, n_actions, bf16_elem=bf16_elem)
    assert out.shape == (2, n_actions)
    assert jnp.allclose(out, ref, atol=2e-3, rtol=2e-3)

    # Case 2: multi-step grid with an awkward user block size (rounded up to 16).
    state2 = jax.random.normal(kx2, (40, input_dim), dtype=jnp.float32)
    out2 = jax.block_until_ready(
        actor_forward(state2, params, n_actions, block_b=8, bf16_elem=bf16_elem))
    ref2 = actor_forward_ref(state2, params, n_actions, bf16_elem=bf16_elem)
    assert out2.shape == (40, n_actions)
    assert jnp.allclose(out2, ref2, atol=2e-3, rtol=2e-3)

    # Case 3: larger batch on the default 2048-row tile (exercises padding + pipelining).
    state3 = jax.random.normal(kx3, (2500, input_dim), dtype=jnp.float32)
    out3 = jax.block_until_ready(actor_forward(state3, params, n_actions, bf16_elem=bf16_elem))
    ref3 = actor_forward_ref(state3, params, n_actions, bf16_elem=bf16_elem)
    assert out3.shape == (2500, n_actions)
    assert jnp.allclose(out3, ref3, atol=2e-3, rtol=2e-3)

    print("KERNEL_OK")
</pallas_src>

<mosaic_0001>
module attributes {stable_mosaic.version = 11 : i64} {
  func.func @actor_kernel(%arg0: i32, %arg1: memref<16x8xbf16, #tpu.memory_space<vmem>>, %arg2: memref<8x256xbf16, #tpu.memory_space<vmem>>, %arg3: memref<1x256xf32, #tpu.memory_space<vmem>>, %arg4: memref<256x256xbf16, #tpu.memory_space<vmem>>, %arg5: memref<1x256xf32, #tpu.memory_space<vmem>>, %arg6: memref<256x8xbf16, #tpu.memory_space<vmem>>, %arg7: memref<1x8xf32, #tpu.memory_space<vmem>>, %arg8: memref<16x8xbf16, #tpu.memory_space<vmem>>) attributes {dimension_semantics = [#tpu.dimension_semantics<parallel>], iteration_bounds = array<i64: 1>, scalar_prefetch = 0 : i64, scratch_operands = 0 : i64, tpu.core_type = #tpu.core_type<tc>, window_params = [{transform_indices = @transform_0, window_bounds = array<i64: 16, 8>}, {pipeline_mode = #tpu.pipeline_mode<synchronous>, transform_indices = @transform_1, window_bounds = array<i64: 8, 256>}, {pipeline_mode = #tpu.pipeline_mode<synchronous>, transform_indices = @transform_2, window_bounds = array<i64: 1, 256>}, {pipeline_mode = #tpu.pipeline_mode<synchronous>, transform_indices = @transform_3, window_bounds = array<i64: 256, 256>}, {pipeline_mode = #tpu.pipeline_mode<synchronous>, transform_indices = @transform_4, window_bounds = array<i64: 1, 256>}, {pipeline_mode = #tpu.pipeline_mode<synchronous>, transform_indices = @transform_5, window_bounds = array<i64: 256, 8>}, {pipeline_mode = #tpu.pipeline_mode<synchronous>, transform_indices = @transform_6, window_bounds = array<i64: 1, 8>}, {transform_indices = @transform_7, window_bounds = array<i64: 16, 8>}]} {
    %c0 = arith.constant 0 : index
    %c0_0 = arith.constant 0 : index
    %0 = vector.load %arg1[%c0, %c0_0] : memref<16x8xbf16, #tpu.memory_space<vmem>>, vector<16x8xbf16>
    %c0_1 = arith.constant 0 : index
    %c0_2 = arith.constant 0 : index
    %1 = vector.load %arg2[%c0_1, %c0_2] : memref<8x256xbf16, #tpu.memory_space<vmem>>, vector<8x256xbf16>
    %cst = arith.constant dense<0.000000e+00> : vector<16x256xf32>
    %2 = tpu.matmul %0, %1, %cst {dimension_numbers = #tpu.dot_dimension_numbers<[1], [0], [0], [1], [0, 0, 1, 1], [], []>} : vector<16x8xbf16>, vector<8x256xbf16>, vector<16x256xf32> -> vector<16x256xf32>
    %3 = arith.truncf %2 : vector<16x256xf32> to vector<16x256xbf16>
    %c0_3 = arith.constant 0 : index
    %c0_4 = arith.constant 0 : index
    %4 = vector.load %arg3[%c0_3, %c0_4] : memref<1x256xf32, #tpu.memory_space<vmem>>, vector<1x256xf32>
    %5 = arith.truncf %4 : vector<1x256xf32> to vector<1x256xbf16>
    %6 = vector.broadcast %5 : vector<1x256xbf16> to vector<16x256xbf16>
    %7 = arith.addf %3, %6 : vector<16x256xbf16>
    %cst_5 = arith.constant 0.000000e+00 : bf16
    %8 = vector.broadcast %cst_5 : bf16 to vector<16x256xbf16>
    %9 = arith.maximumf %7, %8 : vector<16x256xbf16>
    %c0_6 = arith.constant 0 : index
    %c0_7 = arith.constant 0 : index
    %10 = vector.load %arg4[%c0_6, %c0_7] : memref<256x256xbf16, #tpu.memory_space<vmem>>, vector<256x256xbf16>
    %cst_8 = arith.constant dense<0.000000e+00> : vector<16x256xf32>
    %11 = tpu.matmul %9, %10, %cst_8 {dimension_numbers = #tpu.dot_dimension_numbers<[1], [0], [0], [1], [0, 0, 1, 1], [], []>} : vector<16x256xbf16>, vector<256x256xbf16>, vector<16x256xf32> -> vector<16x256xf32>
    %12 = arith.truncf %11 : vector<16x256xf32> to vector<16x256xbf16>
    %c0_9 = arith.constant 0 : index
    %c0_10 = arith.constant 0 : index
    %13 = vector.load %arg5[%c0_9, %c0_10] : memref<1x256xf32, #tpu.memory_space<vmem>>, vector<1x256xf32>
    %14 = arith.truncf %13 : vector<1x256xf32> to vector<1x256xbf16>
    %15 = vector.broadcast %14 : vector<1x256xbf16> to vector<16x256xbf16>
    %16 = arith.addf %12, %15 : vector<16x256xbf16>
    %cst_11 = arith.constant 0.000000e+00 : bf16
    %17 = vector.broadcast %cst_11 : bf16 to vector<16x256xbf16>
    %18 = arith.maximumf %16, %17 : vector<16x256xbf16>
    %c0_12 = arith.constant 0 : index
    %c0_13 = arith.constant 0 : index
    %19 = vector.load %arg6[%c0_12, %c0_13] : memref<256x8xbf16, #tpu.memory_space<vmem>>, vector<256x8xbf16>
    %cst_14 = arith.constant dense<0.000000e+00> : vector<16x8xf32>
    %20 = tpu.matmul %18, %19, %cst_14 {dimension_numbers = #tpu.dot_dimension_numbers<[1], [0], [0], [1], [0, 0, 1, 1], [], []>} : vector<16x256xbf16>, vector<256x8xbf16>, vector<16x8xf32> -> vector<16x8xf32>
    %c0_15 = arith.constant 0 : index
    %c0_16 = arith.constant 0 : index
    %21 = vector.load %arg7[%c0_15, %c0_16] : memref<1x8xf32, #tpu.memory_space<vmem>>, vector<1x8xf32>
    %22 = vector.broadcast %21 : vector<1x8xf32> to vector<16x8xf32>
    %23 = arith.addf %20, %22 : vector<16x8xf32>
    %24 = math.tanh %23 : vector<16x8xf32>
    %25 = arith.truncf %24 : vector<16x8xf32> to vector<16x8xbf16>
    %c0_17 = arith.constant 0 : index
    %c0_18 = arith.constant 0 : index
    %26 = vector.load %arg8[%c0_17, %c0_18] : memref<16x8xbf16, #tpu.memory_space<vmem>>, vector<16x8xbf16>
    tpu.vector_store %arg8[%c0_17, %c0_18], %25 {strides = array<i32>} : memref<16x8xbf16, #tpu.memory_space<vmem>>, vector<16x8xbf16>,
    return
  }
  func.func @transform_0(%arg0: i32) -> (i32, i32) {
    %c0_i32 = arith.constant 0 : i32
    %c0_i32_0 = arith.constant 0 : i32
    return %arg0, %c0_i32 : i32, i32
  }
  func.func @transform_1(%arg0: i32) -> (i32, i32) {
    %c0_i32 = arith.constant 0 : i32
    %c0_i32_0 = arith.constant 0 : i32
    %c0_i32_1 = arith.constant 0 : i32
    return %c0_i32, %c0_i32_0 : i32, i32
  }
  func.func @transform_2(%arg0: i32) -> (i32, i32) {
    %c0_i32 = arith.constant 0 : i32
    %c0_i32_0 = arith.constant 0 : i32
    %c0_i32_1 = arith.constant 0 : i32
    return %c0_i32, %c0_i32_0 : i32, i32
  }
  func.func @transform_3(%arg0: i32) -> (i32, i32) {
    %c0_i32 = arith.constant 0 : i32
    %c0_i32_0 = arith.constant 0 : i32
    %c0_i32_1 = arith.constant 0 : i32
    return %c0_i32, %c0_i32_0 : i32, i32
  }
  func.func @transform_4(%arg0: i32) -> (i32, i32) {
    %c0_i32 = arith.constant 0 : i32
    %c0_i32_0 = arith.constant 0 : i32
    %c0_i32_1 = arith.constant 0 : i32
    return %c0_i32, %c0_i32_0 : i32, i32
  }
  func.func @transform_5(%arg0: i32) -> (i32, i32) {
    %c0_i32 = arith.constant 0 : i32
    %c0_i32_0 = arith.constant 0 : i32
    %c0_i32_1 = arith.constant 0 : i32
    return %c0_i32, %c0_i32_0 : i32, i32
  }
  func.func @transform_6(%arg0: i32) -> (i32, i32) {
    %c0_i32 = arith.constant 0 : i32
    %c0_i32_0 = arith.constant 0 : i32
    %c0_i32_1 = arith.constant 0 : i32
    return %c0_i32, %c0_i32_0 : i32, i32
  }
  func.func @transform_7(%arg0: i32) -> (i32, i32) {
    %c0_i32 = arith.constant 0 : i32
    %c0_i32_0 = arith.constant 0 : i32
    return %arg0, %c0_i32 : i32, i32
  }
}

</mosaic_0001>

<llo_original>
// kernel: actor_forward.1
$region0: #{actor_forward.1}
  #allocation0 [shape = 'u32[]', space=smem, size = 0x4, offset = 0x4, fixed_abs, tag = 'smem constant byte address 0x4 - core index']
  #allocation1 [shape = 'u32[144,128]{1,0:T(1,128)}', space=vmem, size = 0x12000, scoped, tag = 'internal scratch']
  %s0 = inlined_call_operand.vmem [shape: bf16[16,8], index: 0, kind: input, shape index: {}]
  %s1 = inlined_call_operand.vmem [shape: bf16[8,256], index: 1, kind: input, shape index: {}]
  %s2 = inlined_call_operand.vmem [shape: f32[1,256], index: 2, kind: input, shape index: {}]
  %s3 = inlined_call_operand.hbm [shape: bf16[256,256], index: 3, kind: input, shape index: {}]
  %s4 = inlined_call_operand.vmem [shape: f32[1,256], index: 4, kind: input, shape index: {}]
  %s5 = inlined_call_operand.vmem [shape: bf16[256,8], index: 5, kind: input, shape index: {}]
  %s6 = inlined_call_operand.vmem [shape: f32[1,8], index: 6, kind: input, shape index: {}]
  %s7 = inlined_call_operand.vmem [shape: bf16[16,8], index: 7, kind: output, shape index: {}]
  %s8 = sld [smem:[#allocation0]]
  $region42: #{actor_forward.1} parent=0
    _
  %s10 = ssub.s32 1, %s8
  %s11 = scalar_select 0, %s10, %s8
  $region1: #{actor_forward.1} parent=0
    #allocation2 [shape = 'u8[131072]{0}', space=vmem, size = 0x20000, scoped, tag = 'input window, operand 3, single buffered']
    #allocation3 [shape = 's32[1]{0}', space=sflag, size = 0x4, scoped, tag = 'scoped memory for actor_forward.1']
    %12 = vsyncpa [#allocation3], 0
    // Predicated region
    $region2: #{actor_forward.1} parent=1 // pred_check
      _
    $region3: #{actor_forward.1} parent=1 // pred_check_branch
      %14 = sbr.rel (0) target = $region5
    $region4: #{actor_forward.1} parent=1 // pred_region
      _
    $region5: #{actor_forward.1} parent=1 // pred_fallthru
      _
    // Predicated region
    $region6: #{actor_forward.1} parent=1 // pred_check
      _
    $region7: #{actor_forward.1} parent=1 // pred_check_branch
      %16 = sbr.rel (0) target = $region9
    $region8: #{actor_forward.1} parent=1 // pred_region
      _
    $region9: #{actor_forward.1} parent=1 // pred_fallthru
      _
    // Predicated region
    $region10: #{actor_forward.1} parent=1 // pred_check
      _
    $region11: #{actor_forward.1} parent=1 // pred_check_branch
      %18 = sbr.rel (0) target = $region13
    $region12: #{actor_forward.1} parent=1 // pred_region
      _
    $region13: #{actor_forward.1} parent=1 // pred_fallthru
      _
    // Predicated region
    $region14: #{actor_forward.1} parent=1 // pred_check
      _
    $region15: #{actor_forward.1} parent=1 // pred_check_branch
      %20 = sbr.rel (0) target = $region17
    $region16: #{actor_forward.1} parent=1 // pred_region
      %s22 = ssub.s32 4096, 4096
      %23 = vsyncadd [#allocation3], %s22
      %s24 = sshll.u32 [#allocation2], 4
      %s25 = int_to_ptr.vmem [resolvable:$true] %s24
      %30 = dma.hbm_to_vmem [thread:$0]  %s3, 4096, %s25, [#allocation3], 128, 128, 8
    $region17: #{actor_forward.1} parent=1 // pred_fallthru
      _
    // Predicated region
    $region18: #{actor_forward.1} parent=1 // pred_check
      _
    $region19: #{actor_forward.1} parent=1 // pred_check_branch
      %32 = sbr.rel (0) target = $region21
    $region20: #{actor_forward.1} parent=1 // pred_region
      _
    $region21: #{actor_forward.1} parent=1 // pred_fallthru
      _
    // Predicated region
    $region22: #{actor_forward.1} parent=1 // pred_check
      _
    $region23: #{actor_forward.1} parent=1 // pred_check_branch
      %34 = sbr.rel (0) target = $region25
    $region24: #{actor_forward.1} parent=1 // pred_region
      _
    $region25: #{actor_forward.1} parent=1 // pred_fallthru
      _
    // Predicated region
    $region26: #{actor_forward.1} parent=1 // pred_check
      _
    $region27: #{actor_forward.1} parent=1 // pred_check_branch
      %36 = sbr.rel (0) target = $region29
    $region28: #{actor_forward.1} parent=1 // pred_region
      _
    $region29: #{actor_forward.1} parent=1 // pred_fallthru
      _
    // Predicated region
    $region30: #{actor_forward.1} parent=1 // pred_check
      _
    $region31: #{actor_forward.1} parent=1 // pred_check_branch
      %38 = sbr.rel (0) target = $region33
    $region32: #{actor_forward.1} parent=1 // pred_region
      %39 = dma.done [#allocation3], 4096
    $region33: #{actor_forward.1} parent=1 // pred_fallthru
      _
    %v41 = vld [vmem:[%s0] sm:$0xf]
    %v42 = vld [vmem:[%s0 + $0x4] sm:$0xf]
    %v43 = vld [vmem:[%s1] sm:$0xff]
    %v46 = vunpack.c.l.b16 %v41
    %v47 = vunpack.c.l.b16 %v42
    %v48 = vpack.c.b16 %v47, %v46
    %v50 = vunpack.c.l.b16 %v43
    %v51 = vunpack.c.h.b16 %v43
    %v52 = vpack.c.b16 %v50, %v50
    %v53 = vpack.c.b16 %v51, %v51
    %vm54 = vcmask 64512
    %v56 = vsel %vm54, %v48, 0
    %vm58 = vcmask 1043456
    %v60 = vsel %vm58, %v52, 0
    %v63 = vsel %vm58, %v53, 0
    %65 = vmatprep.subr.bf16.mxu0 %v63
    %66 = vmatpush1.bf16.msra.mxu0 %v60
    %67 = vmatprep.subr.bf16.mxu0 0
    %68 = vmatpush1.bf16.msra.mxu0 0
    %69 = vmatprep.subr.bf16.mxu0 0
    %70 = vmatpush1.bf16.msra.mxu0 0
    %71 = vmatprep.subr.bf16.mxu0 0
    %72 = vmatpush1.bf16.msra.mxu0 0
    %73 = vmatprep.subr.bf16.mxu0 0
    %74 = vmatpush1.bf16.msra.mxu0 0
    %75 = vmatprep.subr.bf16.mxu0 0
    %76 = vmatpush1.bf16.msra.mxu0 0
    %77 = vmatprep.subr.bf16.mxu0 0
    %78 = vmatpush1.bf16.msra.mxu0 0
    %79 = vmatprep.subr.bf16.mxu0 0
    %80 = vmatpush1.bf16.msra.mxu0 0
    %81 = vmatprep.subr.bf16.mxu0 0
    %82 = vmatpush1.bf16.msra.mxu0 0
    %83 = vmatprep.subr.bf16.mxu0 0
    %84 = vmatpush1.bf16.msra.mxu0 0
    %85 = vmatprep.subr.bf16.mxu0 0
    %86 = vmatpush1.bf16.msra.mxu0 0
    %87 = vmatprep.subr.bf16.mxu0 0
    %88 = vmatpush1.bf16.msra.mxu0 0
    %89 = vmatprep.subr.bf16.mxu0 0
    %90 = vmatpush1.bf16.msra.mxu0 0
    %91 = vmatprep.subr.bf16.mxu0 0
    %92 = vmatpush1.bf16.msra.mxu0 0
    %93 = vmatprep.subr.bf16.mxu0 0
    %94 = vmatpush1.bf16.msra.mxu0 0
    %95 = vmatprep.subr.bf16.mxu0 0
    %96 = vmatpush1.bf16.msra.mxu0 0
    %97 = vmatprep.mubr.bf16.mxu0 0
    %98 = vmatmul.mubr.bf16.gmra.mrb[0].mxu0 %v56
    %v99 = vpop.f32.mrb[0].mxu0
    %v100 = vadd.f32 0.0, %v99
    %v101 = vpop.f32.mrb[0].mxu0
    %v102 = vadd.f32 0.0, %v101
    %v103 = vpop.f32.mrb[0].mxu0
    %v104 = vadd.f32 0.0, %v103
    %v105 = vpop.f32.mrb[0].mxu0
    %v106 = vadd.f32 0.0, %v105
    %107 = vdwg.mxu0
    %v108 = vpack.c.bf16 %v104, %v100
    %v109 = vpack.c.bf16 %v106, %v102
    %v110 = vld [vmem:[%s2] sm:$0x3]
    %v112 = vlaneseq
    %v113 = vshrl.u32 %v112, 7
    %v114 = vsub.s32 0, %v113
    %v115 = vrot.slane %v110, %v114
    %v116 = vlaneseq
    %v117 = vshrl.u32 %v116, 7
    %v118 = vsub.s32 1, %v117
    %v119 = vrot.slane %v110, %v118
    %v122 = vpack.c.bf16 %v115, %v115
    %v123 = vpack.c.bf16 %v119, %v119
    %v125 = vpack.i.b16 %v122, %v122
    %v127 = vlaneseq
    %v128 = vshrl.u32 %v127, 7
    %v129 = vsub.s32 0, %v128
    %v130 = vrot.slane %v125, %v129
    %v132 = vpack.i.b16 %v123, %v123
    %v134 = vlaneseq
    %v135 = vshrl.u32 %v134, 7
    %v136 = vsub.s32 0, %v135
    %v137 = vrot.slane %v132, %v136
    %v138 = vadd.bf16 %v108, %v130
    %v139 = vadd.bf16 %v109, %v137
    %v140 = vmax.bf16 %v138, 0
    %v141 = vmax.bf16 %v139, 0
    %v142 = vld [vmem:[#allocation2] sm:$0xff]
    %v143 = vld [vmem:[#allocation2 + $0x8] sm:$0xff]
    %v144 = vld [vmem:[#allocation2 + $0x10] sm:$0xff]
    %v145 = vld [vmem:[#allocation2 + $0x18] sm:$0xff]
    %v146 = vld [vmem:[#allocation2 + $0x20] sm:$0xff]
    %v147 = vld [vmem:[#allocation2 + $0x28] sm:$0xff]
    %v148 = vld [vmem:[#allocation2 + $0x30] sm:$0xff]
    %v149 = vld [vmem:[#allocation2 + $0x38] sm:$0xff]
    %v150 = vld [vmem:[#allocation2 + $0x40] sm:$0xff]
    %v151 = vld [vmem:[#allocation2 + $0x48] sm:$0xff]
    %v152 = vld [vmem:[#allocation2 + $0x50] sm:$0xff]
    %v153 = vld [vmem:[#allocation2 + $0x58] sm:$0xff]
    %v154 = vld [vmem:[#allocation2 + $0x60] sm:$0xff]
    %v155 = vld [vmem:[#allocation2 + $0x68] sm:$0xff]
    %v156 = vld [vmem:[#allocation2 + $0x70] sm:$0xff]
    %v157 = vld [vmem:[#allocation2 + $0x78] sm:$0xff]
    %v158 = vld [vmem:[#allocation2 + $0x80] sm:$0xff]
    %v159 = vld [vmem:[#allocation2 + $0x88] sm:$0xff]
    %v160 = vld [vmem:[#allocation2 + $0x90] sm:$0xff]
    %v161 = vld [vmem:[#allocation2 + $0x98] sm:$0xff]
    %v162 = vld [vmem:[#allocation2 + $0xa0] sm:$0xff]
    %v163 = vld [vmem:[#allocation2 + $0xa8] sm:$0xff]
    %v164 = vld [vmem:[#allocation2 + $0xb0] sm:$0xff]
    %v165 = vld [vmem:[#allocation2 + $0xb8] sm:$0xff]
    %v166 = vld [vmem:[#allocation2 + $0xc0] sm:$0xff]
    %v167 = vld [vmem:[#allocation2 + $0xc8] sm:$0xff]
    %v168 = vld [vmem:[#allocation2 + $0xd0] sm:$0xff]
    %v169 = vld [vmem:[#allocation2 + $0xd8] sm:$0xff]
    %v170 = vld [vmem:[#allocation2 + $0xe0] sm:$0xff]
    %v171 = vld [vmem:[#allocation2 + $0xe8] sm:$0xff]
    %v172 = vld [vmem:[#allocation2 + $0xf0] sm:$0xff]
    %v173 = vld [vmem:[#allocation2 + $0xf8] sm:$0xff]
    %v206 = vunpack.c.l.b16 %v142
    %v207 = vunpack.c.h.b16 %v142
    %v208 = vunpack.c.l.b16 %v143
    %v209 = vunpack.c.h.b16 %v143
    %v210 = vunpack.c.l.b16 %v144
    %v211 = vunpack.c.h.b16 %v144
    %v212 = vunpack.c.l.b16 %v145
    %v213 = vunpack.c.h.b16 %v145
    %v214 = vunpack.c.l.b16 %v146
    %v215 = vunpack.c.h.b16 %v146
    %v216 = vunpack.c.l.b16 %v147
    %v217 = vunpack.c.h.b16 %v147
    %v218 = vunpack.c.l.b16 %v148
    %v219 = vunpack.c.h.b16 %v148
    %v220 = vunpack.c.l.b16 %v149
    %v221 = vunpack.c.h.b16 %v149
    %v222 = vunpack.c.l.b16 %v150
    %v223 = vunpack.c.h.b16 %v150
    %v224 = vunpack.c.l.b16 %v151
    %v225 = vunpack.c.h.b16 %v151
    %v226 = vunpack.c.l.b16 %v152
    %v227 = vunpack.c.h.b16 %v152
    %v228 = vunpack.c.l.b16 %v153
    %v229 = vunpack.c.h.b16 %v153
    %v230 = vunpack.c.l.b16 %v154
    %v231 = vunpack.c.h.b16 %v154
    %v232 = vunpack.c.l.b16 %v155
    %v233 = vunpack.c.h.b16 %v155
    %v234 = vunpack.c.l.b16 %v156
    %v235 = vunpack.c.h.b16 %v156
    %v236 = vunpack.c.l.b16 %v157
    %v237 = vunpack.c.h.b16 %v157
    %v238 = vunpack.c.l.b16 %v158
    %v239 = vunpack.c.h.b16 %v158
    %v240 = vunpack.c.l.b16 %v159
    %v241 = vunpack.c.h.b16 %v159
    %v242 = vunpack.c.l.b16 %v160
    %v243 = vunpack.c.h.b16 %v160
    %v244 = vunpack.c.l.b16 %v161
    %v245 = vunpack.c.h.b16 %v161
    %v246 = vunpack.c.l.b16 %v162
    %v247 = vunpack.c.h.b16 %v162
    %v248 = vunpack.c.l.b16 %v163
    %v249 = vunpack.c.h.b16 %v163
    %v250 = vunpack.c.l.b16 %v164
    %v251 = vunpack.c.h.b16 %v164
    %v252 = vunpack.c.l.b16 %v165
    %v253 = vunpack.c.h.b16 %v165
    %v254 = vunpack.c.l.b16 %v166
    %v255 = vunpack.c.h.b16 %v166
    %v256 = vunpack.c.l.b16 %v167
    %v257 = vunpack.c.h.b16 %v167
    %v258 = vunpack.c.l.b16 %v168
    %v259 = vunpack.c.h.b16 %v168
    %v260 = vunpack.c.l.b16 %v169
    %v261 = vunpack.c.h.b16 %v169
    %v262 = vunpack.c.l.b16 %v170
    %v263 = vunpack.c.h.b16 %v170
    %v264 = vunpack.c.l.b16 %v171
    %v265 = vunpack.c.h.b16 %v171
    %v266 = vunpack.c.l.b16 %v172
    %v267 = vunpack.c.h.b16 %v172
    %v268 = vunpack.c.l.b16 %v173
    %v269 = vunpack.c.h.b16 %v173
    %v270 = vpack.c.b16 %v208, %v206
    %v271 = vpack.c.b16 %v209, %v207
    %v272 = vpack.c.b16 %v212, %v210
    %v273 = vpack.c.b16 %v213, %v211
    %v274 = vpack.c.b16 %v216, %v214
    %v275 = vpack.c.b16 %v217, %v215
    %v276 = vpack.c.b16 %v220, %v218
    %v277 = vpack.c.b16 %v221, %v219
    %v278 = vpack.c.b16 %v224, %v222
    %v279 = vpack.c.b16 %v225, %v223
    %v280 = vpack.c.b16 %v228, %v226
    %v281 = vpack.c.b16 %v229, %v227
    %v282 = vpack.c.b16 %v232, %v230
    %v283 = vpack.c.b16 %v233, %v231
    %v284 = vpack.c.b16 %v236, %v234
    %v285 = vpack.c.b16 %v237, %v235
    %v286 = vpack.c.b16 %v240, %v238
    %v287 = vpack.c.b16 %v241, %v239
    %v288 = vpack.c.b16 %v244, %v242
    %v289 = vpack.c.b16 %v245, %v243
    %v290 = vpack.c.b16 %v248, %v246
    %v291 = vpack.c.b16 %v249, %v247
    %v292 = vpack.c.b16 %v252, %v250
    %v293 = vpack.c.b16 %v253, %v251
    %v294 = vpack.c.b16 %v256, %v254
    %v295 = vpack.c.b16 %v257, %v255
    %v296 = vpack.c.b16 %v260, %v258
    %v297 = vpack.c.b16 %v261, %v259
    %v298 = vpack.c.b16 %v264, %v262
    %v299 = vpack.c.b16 %v265, %v263
    %v300 = vpack.c.b16 %v268, %v266
    %v301 = vpack.c.b16 %v269, %v267
    %334 = vmatprep.subr.bf16.mxu0 %v271
    %335 = vmatpush1.bf16.msra.mxu0 %v270
    %336 = vmatprep.subr.bf16.mxu0 %v273
    %337 = vmatpush1.bf16.msra.mxu0 %v272
    %338 = vmatprep.subr.bf16.mxu0 %v275
    %339 = vmatpush1.bf16.msra.mxu0 %v274
    %340 = vmatprep.subr.bf16.mxu0 %v277
    %341 = vmatpush1.bf16.msra.mxu0 %v276
    %342 = vmatprep.subr.bf16.mxu0 %v279
    %343 = vmatpush1.bf16.msra.mxu0 %v278
    %344 = vmatprep.subr.bf16.mxu0 %v281
    %345 = vmatpush1.bf16.msra.mxu0 %v280
    %346 = vmatprep.subr.bf16.mxu0 %v283
    %347 = vmatpush1.bf16.msra.mxu0 %v282
    %348 = vmatprep.subr.bf16.mxu0 %v285
    %349 = vmatpush1.bf16.msra.mxu0 %v284
    %350 = vmatprep.subr.bf16.mxu0 %v287
    %351 = vmatpush1.bf16.msra.mxu0 %v286
    %352 = vmatprep.subr.bf16.mxu0 %v289
    %353 = vmatpush1.bf16.msra.mxu0 %v288
    %354 = vmatprep.subr.bf16.mxu0 %v291
    %355 = vmatpush1.bf16.msra.mxu0 %v290
    %356 = vmatprep.subr.bf16.mxu0 %v293
    %357 = vmatpush1.bf16.msra.mxu0 %v292
    %358 = vmatprep.subr.bf16.mxu0 %v295
    %359 = vmatpush1.bf16.msra.mxu0 %v294
    %360 = vmatprep.subr.bf16.mxu0 %v297
    %361 = vmatpush1.bf16.msra.mxu0 %v296
    %362 = vmatprep.subr.bf16.mxu0 %v299
    %363 = vmatpush1.bf16.msra.mxu0 %v298
    %364 = vmatprep.subr.bf16.mxu0 %v301
    %365 = vmatpush1.bf16.msra.mxu0 %v300
    %366 = vmatprep.mubr.bf16.mxu0 %v141
    %367 = vmatmul.mubr.bf16.gmra.mrb[0].mxu0 %v140
    %v368 = vpop.f32.mrb[0].mxu0
    %v369 = vadd.f32 0.0, %v368
    %v370 = vpop.f32.mrb[0].mxu0
    %v371 = vadd.f32 0.0, %v370
    %v372 = vpop.f32.mrb[0].mxu0
    %v373 = vadd.f32 0.0, %v372
    %v374 = vpop.f32.mrb[0].mxu0
    %v375 = vadd.f32 0.0, %v374
    %376 = vdwg.mxu0
    %v377 = vpack.c.bf16 %v373, %v369
    %v378 = vpack.c.bf16 %v375, %v371
    %v379 = vld [vmem:[%s4] sm:$0x3]
    %v381 = vlaneseq
    %v382 = vshrl.u32 %v381, 7
    %v383 = vsub.s32 0, %v382
    %v384 = vrot.slane %v379, %v383
    %v385 = vlaneseq
    %v386 = vshrl.u32 %v385, 7
    %v387 = vsub.s32 1, %v386
    %v388 = vrot.slane %v379, %v387
    %v391 = vpack.c.bf16 %v384, %v384
    %v392 = vpack.c.bf16 %v388, %v388
    %v394 = vpack.i.b16 %v391, %v391
    %v396 = vlaneseq
    %v397 = vshrl.u32 %v396, 7
    %v398 = vsub.s32 0, %v397
    %v399 = vrot.slane %v394, %v398
    %v401 = vpack.i.b16 %v392, %v392
    %v403 = vlaneseq
    %v404 = vshrl.u32 %v403, 7
    %v405 = vsub.s32 0, %v404
    %v406 = vrot.slane %v401, %v405
    %v407 = vadd.bf16 %v377, %v399
    %v408 = vadd.bf16 %v378, %v406
    %v409 = vmax.bf16 %v407, 0
    %v410 = vmax.bf16 %v408, 0
    %v411 = vld [vmem:[%s5] sm:$0xf]
    %v412 = vld [vmem:[%s5 + $0x4] sm:$0xf]
    %v413 = vld [vmem:[%s5 + $0x8] sm:$0xf]
    %v414 = vld [vmem:[%s5 + $0xc] sm:$0xf]
    %v415 = vld [vmem:[%s5 + $0x10] sm:$0xf]
    %v416 = vld [vmem:[%s5 + $0x14] sm:$0xf]
    %v417 = vld [vmem:[%s5 + $0x18] sm:$0xf]
    %v418 = vld [vmem:[%s5 + $0x1c] sm:$0xf]
    %v419 = vld [vmem:[%s5 + $0x20] sm:$0xf]
    %v420 = vld [vmem:[%s5 + $0x24] sm:$0xf]
    %v421 = vld [vmem:[%s5 + $0x28] sm:$0xf]
    %v422 = vld [vmem:[%s5 + $0x2c] sm:$0xf]
    %v423 = vld [vmem:[%s5 + $0x30] sm:$0xf]
    %v424 = vld [vmem:[%s5 + $0x34] sm:$0xf]
    %v425 = vld [vmem:[%s5 + $0x38] sm:$0xf]
    %v426 = vld [vmem:[%s5 + $0x3c] sm:$0xf]
    %v427 = vld [vmem:[%s5 + $0x40] sm:$0xf]
    %v428 = vld [vmem:[%s5 + $0x44] sm:$0xf]
    %v429 = vld [vmem:[%s5 + $0x48] sm:$0xf]
    %v430 = vld [vmem:[%s5 + $0x4c] sm:$0xf]
    %v431 = vld [vmem:[%s5 + $0x50] sm:$0xf]
    %v432 = vld [vmem:[%s5 + $0x54] sm:$0xf]
    %v433 = vld [vmem:[%s5 + $0x58] sm:$0xf]
    %v434 = vld [vmem:[%s5 + $0x5c] sm:$0xf]
    %v435 = vld [vmem:[%s5 + $0x60] sm:$0xf]
    %v436 = vld [vmem:[%s5 + $0x64] sm:$0xf]
    %v437 = vld [vmem:[%s5 + $0x68] sm:$0xf]
    %v438 = vld [vmem:[%s5 + $0x6c] sm:$0xf]
    %v439 = vld [vmem:[%s5 + $0x70] sm:$0xf]
    %v440 = vld [vmem:[%s5 + $0x74] sm:$0xf]
    %v441 = vld [vmem:[%s5 + $0x78] sm:$0xf]
    %v442 = vld [vmem:[%s5 + $0x7c] sm:$0xf]
    %v443 = vld [vmem:[%s6] sm:$0x1]
    %v445 = vlaneseq
    %v446 = vshrl.u32 %v445, 7
    %v447 = vsub.s32 0, %v446
    %v448 = vrot.slane %v443, %v447
    %v482 = vunpack.c.l.b16 %v411
    %v483 = vunpack.c.l.b16 %v412
    %v484 = vunpack.c.l.b16 %v413
    %v485 = vunpack.c.l.b16 %v414
    %v486 = vunpack.c.l.b16 %v415
    %v487 = vunpack.c.l.b16 %v416
    %v488 = vunpack.c.l.b16 %v417
    %v489 = vunpack.c.l.b16 %v418
    %v490 = vunpack.c.l.b16 %v419
    %v491 = vunpack.c.l.b16 %v420
    %v492 = vunpack.c.l.b16 %v421
    %v493 = vunpack.c.l.b16 %v422
    %v494 = vunpack.c.l.b16 %v423
    %v495 = vunpack.c.l.b16 %v424
    %v496 = vunpack.c.l.b16 %v425
    %v497 = vunpack.c.l.b16 %v426
    %v498 = vunpack.c.l.b16 %v427
    %v499 = vunpack.c.l.b16 %v428
    %v500 = vunpack.c.l.b16 %v429
    %v501 = vunpack.c.l.b16 %v430
    %v502 = vunpack.c.l.b16 %v431
    %v503 = vunpack.c.l.b16 %v432
    %v504 = vunpack.c.l.b16 %v433
    %v505 = vunpack.c.l.b16 %v434
    %v506 = vunpack.c.l.b16 %v435
    %v507 = vunpack.c.l.b16 %v436
    %v508 = vunpack.c.l.b16 %v437
    %v509 = vunpack.c.l.b16 %v438
    %v510 = vunpack.c.l.b16 %v439
    %v511 = vunpack.c.l.b16 %v440
    %v512 = vunpack.c.l.b16 %v441
    %v513 = vunpack.c.l.b16 %v442
    %v514 = vpack.c.b16 %v483, %v482
    %v515 = vpack.c.b16 %v485, %v484
    %v516 = vpack.c.b16 %v487, %v486
    %v517 = vpack.c.b16 %v489, %v488
    %v518 = vpack.c.b16 %v491, %v490
    %v519 = vpack.c.b16 %v493, %v492
    %v520 = vpack.c.b16 %v495, %v494
    %v521 = vpack.c.b16 %v497, %v496
    %v522 = vpack.c.b16 %v499, %v498
    %v523 = vpack.c.b16 %v501, %v500
    %v524 = vpack.c.b16 %v503, %v502
    %v525 = vpack.c.b16 %v505, %v504
    %v526 = vpack.c.b16 %v507, %v506
    %v527 = vpack.c.b16 %v509, %v508
    %v528 = vpack.c.b16 %v511, %v510
    %v529 = vpack.c.b16 %v513, %v512
    %546 = vmatprep.subr.bf16.mxu0 0
    %547 = vmatpush1.bf16.msra.mxu0 %v514
    %548 = vmatprep.subr.bf16.mxu0 0
    %549 = vmatpush1.bf16.msra.mxu0 %v515
    %550 = vmatprep.subr.bf16.mxu0 0
    %551 = vmatpush1.bf16.msra.mxu0 %v516
    %552 = vmatprep.subr.bf16.mxu0 0
    %553 = vmatpush1.bf16.msra.mxu0 %v517
    %554 = vmatprep.subr.bf16.mxu0 0
    %555 = vmatpush1.bf16.msra.mxu0 %v518
    %556 = vmatprep.subr.bf16.mxu0 0
    %557 = vmatpush1.bf16.msra.mxu0 %v519
    %558 = vmatprep.subr.bf16.mxu0 0
    %559 = vmatpush1.bf16.msra.mxu0 %v520
    %560 = vmatprep.subr.bf16.mxu0 0
    %561 = vmatpush1.bf16.msra.mxu0 %v521
    %562 = vmatprep.subr.bf16.mxu0 0
    %563 = vmatpush1.bf16.msra.mxu0 %v522
    %564 = vmatprep.subr.bf16.mxu0 0
    %565 = vmatpush1.bf16.msra.mxu0 %v523
    %566 = vmatprep.subr.bf16.mxu0 0
    %567 = vmatpush1.bf16.msra.mxu0 %v524
    %568 = vmatprep.subr.bf16.mxu0 0
    %569 = vmatpush1.bf16.msra.mxu0 %v525
    %570 = vmatprep.subr.bf16.mxu0 0
    %571 = vmatpush1.bf16.msra.mxu0 %v526
    %572 = vmatprep.subr.bf16.mxu0 0
    %573 = vmatpush1.bf16.msra.mxu0 %v527
    %574 = vmatprep.subr.bf16.mxu0 0
    %575 = vmatpush1.bf16.msra.mxu0 %v528
    %576 = vmatprep.subr.bf16.mxu0 0
    %577 = vmatpush1.bf16.msra.mxu0 %v529
    %578 = vmatprep.mubr.bf16.mxu0 %v410
    %579 = vmatmul.mubr.bf16.gmra.mrb[0].mxu0 %v409
    %v580 = vpop.f32.mrb[0].mxu0
    %v581 = vadd.f32 %v448, %v580
    %v582 = vpop.f32.mrb[0].mxu0
    %v583 = vpop.f32.mrb[0].mxu0
    %v584 = vadd.f32 %v448, %v583
    %v585 = vpop.f32.mrb[0].mxu0
    %586 = vdwg.mxu0
    %v587 = vtanh.pop %v581
    %v588 = vtanh.pop %v584
    %v589 = vpack.c.bf16 %v588, %v587
    %v591 = vunpack.c.l.b16 %v589
    %v592 = vunpack.c.h.b16 %v589
    %v593 = vpack.c.b16 %v591, %v591
    %v594 = vpack.c.b16 %v592, %v592
    %vm597 = vcmask 60416
    %598 = vst.msk [vmem:[%s7] sm:$0xf] %vm597, %v593
    %599 = vst.msk [vmem:[%s7 + $0x4] sm:$0xf] %vm597, %v594
    // Predicated region
    $region34: #{actor_forward.1} parent=1 // pred_check
      _
    $region35: #{actor_forward.1} parent=1 // pred_check_branch
      %601 = sbr.rel (0) target = $region37
    $region36: #{actor_forward.1} parent=1 // pred_region
      _
    $region37: #{actor_forward.1} parent=1 // pred_fallthru
      _
    // Predicated region
    $region38: #{actor_forward.1} parent=1 // pred_check
      _
    $region39: #{actor_forward.1} parent=1 // pred_check_branch
      %603 = sbr.rel (0) target = $region41
    $region40: #{actor_forward.1} parent=1 // pred_region
      _
    $region41: #{actor_forward.1} parent=1 // pred_fallthru
      _
    %604 = vsyncpa [#allocation3], 1

</llo_original>
